<compile_context>
chip_gen: v7x
topology: tpu7x:2x2x1
jax: 0.10.0
libtpu: 0.0.40
codegen_flags: <defaults>
</compile_context>

<pallas_src>
import math

import jax
import jax.numpy as jnp
from jax.experimental import pallas as pl
from jax.experimental.pallas import tpu as pltpu

MIB = 1024 * 1024


def make_pe_table(d_model: int, max_len: int = 20) -> jnp.ndarray:
    """Sinusoidal positional-encoding table, matching the PyTorch __init__
    (shape (max_len, d_model), float32)."""
    position = jnp.arange(0, max_len, dtype=jnp.float32)[:, None]              # (L, 1)
    div_term = jnp.exp(
        jnp.arange(0, d_model, 2, dtype=jnp.float32) * (-math.log(10000.0) / d_model)
    )                                                                           # (ceil(D/2),)
    angles = position * div_term                                                # (L, ceil(D/2))
    pe = jnp.zeros((max_len, d_model), dtype=jnp.float32)
    pe = pe.at[:, 0::2].set(jnp.sin(angles))
    # For odd d_model the cos slice only has floor(D/2) columns.
    pe = pe.at[:, 1::2].set(jnp.cos(angles)[:, : d_model // 2])
    return pe


def _pos_enc_kernel(x_ref, pe_ref, o_ref):
    # x_ref:  (row_block, col_block) chunk of flattened activations (x.dtype)
    # pe_ref: (1, col_block)         float32 positional-encoding row (broadcasts)
    # Compute in f32, cast only at the store (matches fp32 pe buffer in PyTorch).
    o_ref[...] = (x_ref[...].astype(jnp.float32) + pe_ref[...]).astype(o_ref.dtype)


def _round_up(n: int, m: int) -> int:
    return ((n + m - 1) // m) * m


def _vmem_capacity_bytes() -> int:
    """Per-core VMEM capacity; conservative (v7x-sized) fallback if unknown."""
    try:
        return int(pltpu.get_tpu_info().vmem_capacity_bytes)
    except Exception:
        return 64 * MIB


def _choose_blocks(B: int, cols: int, itemsize: int, target_bytes: int, sub: int):
    """Pick (row_block, col_block) targeting ~target_bytes per x block."""
    bytes_per_row = cols * itemsize
    if B * bytes_per_row <= target_bytes:
        # Whole array fits in one block.
        return B, cols
    if min(B, sub) * bytes_per_row <= target_bytes or cols <= 128:
        # Row tiling only.
        rb = max(1, target_bytes // bytes_per_row)
        row_block = min(B, max(sub, (rb // sub) * sub))
        return row_block, cols
    # Column-tiling fallback: a single flattened row is too wide for the budget.
    row_block = min(B, sub)
    cb = (target_bytes // (row_block * itemsize) // 128) * 128
    cb = max(128, cb)
    col_block = cols if cb >= cols else cb
    return row_block, col_block


def positional_encoding(x: jnp.ndarray, pe: jnp.ndarray, *, force_pallas: bool = False) -> jnp.ndarray:
    """x: (B, S, D); pe: (max_len, D) float32 with S <= max_len. Returns x + pe[:S]."""
    B, S, D = x.shape
    max_len, d_model = pe.shape
    assert S <= max_len, f"sequence length {S} exceeds max_len {max_len}"
    assert D == d_model

    cols = S * D
    itemsize = jnp.dtype(x.dtype).itemsize
    pe_row = pe[:S, :].astype(jnp.float32).reshape(1, cols)   # keep fp32 (PyTorch parity)

    # Tiny / non-lane-dense guard: for KiB-scale inputs or cols < 128 a plain
    # XLA add (ideally fused into the neighboring op) beats pallas dispatch.
    if not force_pallas and (cols < 128 or B * cols * itemsize < (1 << 16)):
        return (x.astype(jnp.float32) + pe_row.reshape(1, S, D)).astype(x.dtype)

    x2 = x.reshape(B, cols)                                    # lane-dense last dim

    # ---- generation-aware block sizing -----------------------------------
    vmem_cap = _vmem_capacity_bytes()
    # Scoped-VMEM limit we request: 64 MiB on 128-MiB parts (v5e/v6e; raises
    # v5e's 16 MiB default), 32 MiB on 64-MiB v7x parts.
    vmem_limit = int(min(64 * MIB, vmem_cap // 2))
    # Live set ~ 2x x-block + 2x out-block + 2x pe-block; keep it < half the limit.
    target_bytes = max(256 * 1024, vmem_limit // 12)

    # Packed-sublane multiple for full-width stores: 8 f32, 16 bf16, 32 int8/fp8.
    sub = max(8, 32 // itemsize)

    row_block, col_block = _choose_blocks(B, cols, itemsize, target_bytes, sub)

    # Megacore (v7x, 2 TCs/chip): ensure >= 2 grid steps when the batch can be
    # split at the sublane granularity; a no-op cost on 1-TC chips.
    if row_block == B and col_block == cols and B >= 2 * sub:
        row_block = min(B, _round_up(pl.cdiv(B, 2), sub))

    grid = (pl.cdiv(B, row_block), pl.cdiv(cols, col_block))

    out = pl.pallas_call(
        _pos_enc_kernel,
        out_shape=jax.ShapeDtypeStruct((B, cols), x.dtype),
        grid_spec=pl.GridSpec(
            grid=grid,
            in_specs=[
                pl.BlockSpec((row_block, col_block), lambda i, j: (i, j)),
                pl.BlockSpec((1, col_block), lambda i, j: (0, j)),   # constant pe row
            ],
            out_specs=pl.BlockSpec((row_block, col_block), lambda i, j: (i, j)),
        ),
        input_output_aliases={0: 0},                                 # out aliases x2
        compiler_params=pltpu.CompilerParams(
            dimension_semantics=("parallel", "parallel"),
            vmem_limit_bytes=vmem_limit,
        ),
    )(x2, pe_row)

    return out.reshape(B, S, D)


if __name__ == "__main__":
    key = jax.random.PRNGKey(0)
    B, S, D = 2, 8, 32          # batch, seq (<= max_len=20), d_model
    max_len = 20

    x = jax.random.normal(key, (B, S, D), dtype=jnp.float32)
    pe = make_pe_table(D, max_len)

    # f32 path (force_pallas so the kernel actually runs at these toy sizes).
    out = positional_encoding(x, pe, force_pallas=True)
    out = jax.block_until_ready(out)
    ref = x + pe[:S, :][None, :, :]
    assert out.shape == (B, S, D)
    assert jnp.allclose(out, ref, atol=1e-6, rtol=1e-6)

    # bf16 path: pe stays fp32, add happens in f32, cast at the store.
    x_bf16 = x.astype(jnp.bfloat16)
    out_bf16 = jax.block_until_ready(positional_encoding(x_bf16, pe, force_pallas=True))
    ref_bf16 = (x_bf16.astype(jnp.float32) + pe[:S, :][None]).astype(jnp.bfloat16)
    assert out_bf16.dtype == jnp.bfloat16
    assert jnp.array_equal(out_bf16.astype(jnp.float32), ref_bf16.astype(jnp.float32))

    print("KERNEL_OK")
</pallas_src>

<mosaic_0001>
module attributes {stable_mosaic.version = 11 : i64} {
  func.func @_pos_enc_kernel(%arg0: i32, %arg1: i32, %arg2: memref<2x256xf32, #tpu.memory_space<vmem>>, %arg3: memref<1x256xf32, #tpu.memory_space<vmem>>, %arg4: memref<2x256xf32, #tpu.memory_space<vmem>>) attributes {dimension_semantics = [#tpu.dimension_semantics<parallel>, #tpu.dimension_semantics<parallel>], iteration_bounds = array<i64: 1, 1>, scalar_prefetch = 0 : i64, scratch_operands = 0 : i64, tpu.core_type = #tpu.core_type<tc>, window_params = [{transform_indices = @transform_0, window_bounds = array<i64: 2, 256>}, {transform_indices = @transform_1, window_bounds = array<i64: 1, 256>}, {transform_indices = @transform_2, window_bounds = array<i64: 2, 256>}]} {
    %c0 = arith.constant 0 : index
    %c0_0 = arith.constant 0 : index
    %0 = vector.load %arg2[%c0, %c0_0] : memref<2x256xf32, #tpu.memory_space<vmem>>, vector<2x256xf32>
    %c0_1 = arith.constant 0 : index
    %c0_2 = arith.constant 0 : index
    %1 = vector.load %arg3[%c0_1, %c0_2] : memref<1x256xf32, #tpu.memory_space<vmem>>, vector<1x256xf32>
    %2 = vector.broadcast %1 : vector<1x256xf32> to vector<2x256xf32>
    %3 = arith.addf %0, %2 : vector<2x256xf32>
    %c0_3 = arith.constant 0 : index
    %c0_4 = arith.constant 0 : index
    %4 = vector.load %arg4[%c0_3, %c0_4] : memref<2x256xf32, #tpu.memory_space<vmem>>, vector<2x256xf32>
    tpu.vector_store %arg4[%c0_3, %c0_4], %3 {strides = array<i32>} : memref<2x256xf32, #tpu.memory_space<vmem>>, vector<2x256xf32>,
    return
  }
  func.func @transform_0(%arg0: i32, %arg1: i32) -> (i32, i32) {
    %c0_i32 = arith.constant 0 : i32
    return %arg0, %arg1 : i32, i32
  }
  func.func @transform_1(%arg0: i32, %arg1: i32) -> (i32, i32) {
    %c0_i32 = arith.constant 0 : i32
    %c0_i32_0 = arith.constant 0 : i32
    return %c0_i32, %arg1 : i32, i32
  }
  func.func @transform_2(%arg0: i32, %arg1: i32) -> (i32, i32) {
    %c0_i32 = arith.constant 0 : i32
    return %arg0, %arg1 : i32, i32
  }
}

</mosaic_0001>

<llo_original>
// kernel: tpu_custom_call.1
$region0: #{tpu_custom_call.1}
  #allocation0 [shape = 'u32[]', space=smem, size = 0x4, offset = 0x4, fixed_abs, tag = 'smem constant byte address 0x4 - core index']
  #allocation1 [shape = 'u32[144,128]{1,0:T(1,128)}', space=vmem, size = 0x12000, scoped, tag = 'internal scratch']
  %s0 = inlined_call_operand.hbm [shape: f32[2,256], index: 0, kind: input, shape index: {}, may-alias: {0,2}]
  %s1 = inlined_call_operand.vmem [shape: f32[1,256], index: 1, kind: input, shape index: {}]
  %s2 = inlined_call_operand.hbm [shape: f32[2,256], index: 2, kind: output, shape index: {}, may-alias: {0,2}]
  %s3 = sld [smem:[#allocation0]]
  $region22: #{tpu_custom_call.1} parent=0
    _
  %s5 = ssub.s32 1, %s3
  %s6 = scalar_select 0, %s5, %s3
  $region1: #{tpu_custom_call.1} parent=0
    #allocation2 [shape = 'u8[2048]{0}', space=vmem, size = 0x800, scoped, tag = 'input window, operand 0, single buffered']
    #allocation3 [shape = 's32[1]{0}', space=sflag, size = 0x4, scoped, tag = 'scoped memory for tpu_custom_call.1']
    #allocation4 [shape = 's32[1]{0}', space=sflag, size = 0x4, scoped, tag = 'scoped memory for tpu_custom_call.1']
    #allocation5 [shape = 'u8[2048]{0}', space=vmem, size = 0x800, scoped, tag = 'output window, operand 0, single buffered']
    %7 = vsyncpa [#allocation3], 0
    %8 = vsyncpa [#allocation4], 0
    // Predicated region
    $region2: #{tpu_custom_call.1} parent=1 // pred_check
      _
    $region3: #{tpu_custom_call.1} parent=1 // pred_check_branch
      %10 = sbr.rel (0) target = $region5
    $region4: #{tpu_custom_call.1} parent=1 // pred_region
      %s12 = ssub.s32 64, 64
      %13 = vsyncadd [#allocation3], %s12
      %s15 = sshll.u32 [#allocation2], 4
      %s16 = int_to_ptr.vmem [resolvable:$true] %s15
      %18 = dma.hbm_to_vmem [thread:$0]  %s0, 64, %s16, [#allocation3]
    $region5: #{tpu_custom_call.1} parent=1 // pred_fallthru
      _
    // Predicated region
    $region6: #{tpu_custom_call.1} parent=1 // pred_check
      _
    $region7: #{tpu_custom_call.1} parent=1 // pred_check_branch
      %20 = sbr.rel (0) target = $region9
    $region8: #{tpu_custom_call.1} parent=1 // pred_region
      _
    $region9: #{tpu_custom_call.1} parent=1 // pred_fallthru
      _
    // Predicated region
    $region10: #{tpu_custom_call.1} parent=1 // pred_check
      _
    $region11: #{tpu_custom_call.1} parent=1 // pred_check_branch
      %22 = sbr.rel (0) target = $region13
    $region12: #{tpu_custom_call.1} parent=1 // pred_region
      %23 = dma.done [#allocation3], 64
    $region13: #{tpu_custom_call.1} parent=1 // pred_fallthru
      _
    %v24 = vld [vmem:[#allocation2] sm:$0xf]
    %v25 = vld [vmem:[%s1] sm:$0x3]
    %v27 = vlaneseq
    %v28 = vshrl.u32 %v27, 7
    %v29 = vsub.s32 0, %v28
    %v30 = vrot.slane %v25, %v29
    %v31 = vlaneseq
    %v32 = vshrl.u32 %v31, 7
    %v33 = vsub.s32 1, %v32
    %v34 = vrot.slane %v25, %v33
    %v35 = vcombine.low %v30, %v34
    %v37 = vunpack.c.l.s4 1983009808
    %v38 = vunpack.c.0.s8 %v37
    %v39 = vlaneseq
    %v40 = vshrl.u32 %v39, 7
    %v41 = vsub.s32 %v38, %v40
    %v42 = vrot.slane %v35, %v41
    %v44 = vadd.f32 %v24, %v42
    %45 = vst [vmem:[#allocation5] sm:$0xf] %v44
    // Predicated region
    $region14: #{tpu_custom_call.1} parent=1 // pred_check
      _
    $region15: #{tpu_custom_call.1} parent=1 // pred_check_branch
      %47 = sbr.rel (0) target = $region17
    $region16: #{tpu_custom_call.1} parent=1 // pred_region
      %s49 = ssub.s32 64, 64
      %50 = vsyncadd [#allocation4], %s49
      %s52 = sshll.u32 [#allocation5], 4
      %s53 = int_to_ptr.vmem [resolvable:$true] %s52
      %55 = dma.vmem_to_hbm [thread:$0]  %s53, 64, %s2, [#allocation4]
    $region17: #{tpu_custom_call.1} parent=1 // pred_fallthru
      _
    // Predicated region
    $region18: #{tpu_custom_call.1} parent=1 // pred_check
      _
    $region19: #{tpu_custom_call.1} parent=1 // pred_check_branch
      %57 = sbr.rel (0) target = $region21
    $region20: #{tpu_custom_call.1} parent=1 // pred_region
      %58 = dma.done [#allocation4], 64
    $region21: #{tpu_custom_call.1} parent=1 // pred_fallthru
      _
    %59 = vsyncpa [#allocation3], 1
    %60 = vsyncpa [#allocation4], 1

</llo_original>
